<compile_context>
chip_gen: v7x
topology: tpu7x:2x2x1
jax: 0.10.0
libtpu: 0.0.40
codegen_flags: <defaults>
</compile_context>

<pallas_src>
import functools

import jax
import jax.numpy as jnp
from jax.experimental import pallas as pl
from jax.experimental.pallas import tpu as pltpu


PAD = 128  # all hidden/output feature dims are padded to this lane width


def _round_up(n, m):
    return ((n + m - 1) // m) * m


def _mlp_kernel(x_ref, w1_ref, w_ref, b_ref, o_ref):
    """Fused forward pass for one batch tile.  Everything lives in VMEM.

    x_ref : (TB, 64)         input tile
    w1_ref: (64, 128)        fc1 weight (in, out layout)
    w_ref : (3, 128, 128)    fc2/fc3/fc4 weights, zero-padded to 128x128
    b_ref : (4, 128)         fc1..fc4 biases, zero-padded to 128
    o_ref : (TB, 128)        lane-dense output slab (cols 6..127 are zero)
    """
    dt = w1_ref.dtype
    b = b_ref[...]                                               # (4, 128)

    x = x_ref[...]                                               # (TB, 64)

    # fc1 + relu
    h = jnp.dot(x, w1_ref[...], preferred_element_type=jnp.float32)
    h = jnp.maximum(h + b[0:1, :], 0.0)                          # (TB, 128)

    # fc2 + relu
    h = jnp.dot(h.astype(dt), w_ref[0], preferred_element_type=jnp.float32)
    h = jnp.maximum(h + b[1:2, :], 0.0)                          # (TB, 128)

    # fc3 + relu
    h = jnp.dot(h.astype(dt), w_ref[1], preferred_element_type=jnp.float32)
    h = jnp.maximum(h + b[2:3, :], 0.0)                          # (TB, 128)

    # fc4 (no activation)
    h = jnp.dot(h.astype(dt), w_ref[2], preferred_element_type=jnp.float32)
    o_ref[...] = (h + b[3:4, :]).astype(o_ref.dtype)             # (TB, 128)


def prepare_params(params, compute_dtype=jnp.float32):
    """Zero-pad feature dims to 128 and pack weights/biases into few operands."""
    def pad2d(a, shape):
        out = jnp.zeros(shape, compute_dtype)
        return out.at[: a.shape[0], : a.shape[1]].set(a.astype(compute_dtype))

    w1 = params["w1"].astype(compute_dtype)                       # (64, 128)
    w2 = pad2d(params["w2"], (PAD, PAD))                          # (128, 64) -> (128,128)
    w3 = pad2d(params["w3"], (PAD, PAD))                          # (64, 32)  -> (128,128)
    w4 = pad2d(params["w4"], (PAD, PAD))                          # (32, 6)   -> (128,128)
    w_stack = jnp.stack([w2, w3, w4], axis=0)                     # (3, 128, 128)

    b_stack = jnp.stack(
        [pad2d(params[f"b{i}"], (1, PAD))[0] for i in range(1, 5)], axis=0
    )                                                             # (4, 128)
    return w1, w_stack, b_stack


def six_axis_nn_forward(x, params, *, batch_tile=1024,
                        compute_dtype=jnp.float32):
    """x: (B, 64).  Returns (B, 6) float32, matching torch SixAxisNN.forward."""
    B, d_in = x.shape
    assert d_in == 64

    w1, w_stack, b_stack = prepare_params(params, compute_dtype)

    # Pick a batch tile: multiple of 8, no larger than the (padded) batch.
    bt = min(batch_tile, _round_up(B, 8))
    bt = max(8, (bt // 8) * 8)
    B_pad = _round_up(B, bt)

    x_p = x.astype(compute_dtype)
    if B_pad != B:
        x_p = jnp.pad(x_p, ((0, B_pad - B), (0, 0)))

    grid = (B_pad // bt,)

    itemsize = jnp.dtype(compute_dtype).itemsize
    flops = 2 * B_pad * (64 * PAD + 3 * PAD * PAD)
    bytes_accessed = (B_pad * 64 * itemsize                 # x
                      + B_pad * PAD * 4                     # padded f32 output
                      + (w1.size + w_stack.size + b_stack.size) * itemsize)

    out = pl.pallas_call(
        _mlp_kernel,
        out_shape=jax.ShapeDtypeStruct((B_pad, PAD), jnp.float32),
        grid_spec=pltpu.PrefetchScalarGridSpec(
            num_scalar_prefetch=0,
            grid=grid,
            in_specs=[
                pl.BlockSpec((bt, 64), lambda i: (i, 0)),           # x tile
                pl.BlockSpec((64, PAD), lambda i: (0, 0)),          # w1
                pl.BlockSpec((3, PAD, PAD), lambda i: (0, 0, 0)),   # w2..w4
                pl.BlockSpec((4, PAD), lambda i: (0, 0)),           # b1..b4
            ],
            out_specs=pl.BlockSpec((bt, PAD), lambda i: (i, 0)),
        ),
        compiler_params=pltpu.CompilerParams(
            dimension_semantics=("parallel",),
            vmem_limit_bytes=32 * 1024 * 1024),
        cost_estimate=pl.CostEstimate(
            flops=flops, transcendentals=0, bytes_accessed=bytes_accessed),
    )(x_p, w1, w_stack, b_stack)

    return out[:B, :6]


def init_params(key):
    """Deterministic init matching SixAxisNN layer shapes ((in, out) layout)."""
    dims = [(64, 128), (128, 64), (64, 32), (32, 6)]
    params = {}
    keys = jax.random.split(key, 2 * len(dims))
    for idx, (d_in, d_out) in enumerate(dims):
        kw, kb = keys[2 * idx], keys[2 * idx + 1]
        bound = 1.0 / jnp.sqrt(d_in)  # same scale as torch.nn.Linear default
        params[f"w{idx + 1}"] = jax.random.uniform(
            kw, (d_in, d_out), jnp.float32, -bound, bound)
        params[f"b{idx + 1}"] = jax.random.uniform(
            kb, (1, d_out), jnp.float32, -bound, bound)
    return params


def reference_forward(x, params):
    h = jnp.maximum(x @ params["w1"] + params["b1"], 0.0)
    h = jnp.maximum(h @ params["w2"] + params["b2"], 0.0)
    h = jnp.maximum(h @ params["w3"] + params["b3"], 0.0)
    return h @ params["w4"] + params["b4"]


if __name__ == "__main__":
    key = jax.random.PRNGKey(0)
    k_param, k_x = jax.random.split(key)

    params = init_params(k_param)
    # Ragged small batch (not a multiple of 8) to exercise the padding path.
    x = jax.random.normal(k_x, (20, 64), jnp.float32)

    # Exact f32 path (default).  For v6e/v7x throughput, pass
    # compute_dtype=jnp.bfloat16 (f32 MXU accumulation is kept).
    fwd = jax.jit(functools.partial(six_axis_nn_forward, batch_tile=1024))
    y = jax.block_until_ready(fwd(x, params))

    y_ref = reference_forward(x, params)
    assert y.shape == (20, 6)
    assert jnp.allclose(y, y_ref, atol=1e-4, rtol=1e-4)

    print("KERNEL_OK")
</pallas_src>

<mosaic_0001>
module attributes {stable_mosaic.version = 11 : i64} {
  func.func @_mlp_kernel(%arg0: i32, %arg1: memref<24x64xf32, #tpu.memory_space<vmem>>, %arg2: memref<64x128xf32, #tpu.memory_space<vmem>>, %arg3: memref<3x128x128xf32, #tpu.memory_space<vmem>>, %arg4: memref<4x128xf32, #tpu.memory_space<vmem>>, %arg5: memref<24x128xf32, #tpu.memory_space<vmem>>) attributes {dimension_semantics = [#tpu.dimension_semantics<parallel>], iteration_bounds = array<i64: 1>, scalar_prefetch = 0 : i64, scratch_operands = 0 : i64, tpu.core_type = #tpu.core_type<tc>, window_params = [{transform_indices = @transform_0, window_bounds = array<i64: 24, 64>}, {pipeline_mode = #tpu.pipeline_mode<synchronous>, transform_indices = @transform_1, window_bounds = array<i64: 64, 128>}, {pipeline_mode = #tpu.pipeline_mode<synchronous>, transform_indices = @transform_2, window_bounds = array<i64: 3, 128, 128>}, {pipeline_mode = #tpu.pipeline_mode<synchronous>, transform_indices = @transform_3, window_bounds = array<i64: 4, 128>}, {transform_indices = @transform_4, window_bounds = array<i64: 24, 128>}]} {
    %c0 = arith.constant 0 : index
    %c0_0 = arith.constant 0 : index
    %0 = vector.load %arg4[%c0, %c0_0] : memref<4x128xf32, #tpu.memory_space<vmem>>, vector<4x128xf32>
    %c0_1 = arith.constant 0 : index
    %c0_2 = arith.constant 0 : index
    %1 = vector.load %arg1[%c0_1, %c0_2] : memref<24x64xf32, #tpu.memory_space<vmem>>, vector<24x64xf32>
    %c0_3 = arith.constant 0 : index
    %c0_4 = arith.constant 0 : index
    %2 = vector.load %arg2[%c0_3, %c0_4] : memref<64x128xf32, #tpu.memory_space<vmem>>, vector<64x128xf32>
    %cst = arith.constant dense<0.000000e+00> : vector<24x128xf32>
    %3 = tpu.matmul %1, %2, %cst {dimension_numbers = #tpu.dot_dimension_numbers<[1], [0], [0], [1], [0, 0, 1, 1], [], []>} : vector<24x64xf32>, vector<64x128xf32>, vector<24x128xf32> -> vector<24x128xf32>
    %4 = vector.extract_strided_slice %0 {offsets = [0, 0], sizes = [1, 128], strides = [1, 1]} : vector<4x128xf32> to vector<1x128xf32>
    %5 = vector.broadcast %4 : vector<1x128xf32> to vector<24x128xf32>
    %6 = arith.addf %3, %5 : vector<24x128xf32>
    %cst_5 = arith.constant 0.000000e+00 : f32
    %7 = vector.broadcast %cst_5 : f32 to vector<24x128xf32>
    %8 = arith.maximumf %6, %7 : vector<24x128xf32>
    %c0_6 = arith.constant 0 : index
    %c0_7 = arith.constant 0 : index
    %c0_8 = arith.constant 0 : index
    %9 = vector.load %arg3[%c0_6, %c0_7, %c0_8] : memref<3x128x128xf32, #tpu.memory_space<vmem>>, vector<1x128x128xf32>
    %10 = vector.shape_cast %9 : vector<1x128x128xf32> to vector<128x128xf32>
    %cst_9 = arith.constant dense<0.000000e+00> : vector<24x128xf32>
    %11 = tpu.matmul %8, %10, %cst_9 {dimension_numbers = #tpu.dot_dimension_numbers<[1], [0], [0], [1], [0, 0, 1, 1], [], []>} : vector<24x128xf32>, vector<128x128xf32>, vector<24x128xf32> -> vector<24x128xf32>
    %12 = vector.extract_strided_slice %0 {offsets = [1, 0], sizes = [1, 128], strides = [1, 1]} : vector<4x128xf32> to vector<1x128xf32>
    %13 = vector.broadcast %12 : vector<1x128xf32> to vector<24x128xf32>
    %14 = arith.addf %11, %13 : vector<24x128xf32>
    %cst_10 = arith.constant 0.000000e+00 : f32
    %15 = vector.broadcast %cst_10 : f32 to vector<24x128xf32>
    %16 = arith.maximumf %14, %15 : vector<24x128xf32>
    %c1 = arith.constant 1 : index
    %c0_11 = arith.constant 0 : index
    %c0_12 = arith.constant 0 : index
    %17 = vector.load %arg3[%c1, %c0_11, %c0_12] : memref<3x128x128xf32, #tpu.memory_space<vmem>>, vector<1x128x128xf32>
    %18 = vector.shape_cast %17 : vector<1x128x128xf32> to vector<128x128xf32>
    %cst_13 = arith.constant dense<0.000000e+00> : vector<24x128xf32>
    %19 = tpu.matmul %16, %18, %cst_13 {dimension_numbers = #tpu.dot_dimension_numbers<[1], [0], [0], [1], [0, 0, 1, 1], [], []>} : vector<24x128xf32>, vector<128x128xf32>, vector<24x128xf32> -> vector<24x128xf32>
    %20 = vector.extract_strided_slice %0 {offsets = [2, 0], sizes = [1, 128], strides = [1, 1]} : vector<4x128xf32> to vector<1x128xf32>
    %21 = vector.broadcast %20 : vector<1x128xf32> to vector<24x128xf32>
    %22 = arith.addf %19, %21 : vector<24x128xf32>
    %cst_14 = arith.constant 0.000000e+00 : f32
    %23 = vector.broadcast %cst_14 : f32 to vector<24x128xf32>
    %24 = arith.maximumf %22, %23 : vector<24x128xf32>
    %c2 = arith.constant 2 : index
    %c0_15 = arith.constant 0 : index
    %c0_16 = arith.constant 0 : index
    %25 = vector.load %arg3[%c2, %c0_15, %c0_16] : memref<3x128x128xf32, #tpu.memory_space<vmem>>, vector<1x128x128xf32>
    %26 = vector.shape_cast %25 : vector<1x128x128xf32> to vector<128x128xf32>
    %cst_17 = arith.constant dense<0.000000e+00> : vector<24x128xf32>
    %27 = tpu.matmul %24, %26, %cst_17 {dimension_numbers = #tpu.dot_dimension_numbers<[1], [0], [0], [1], [0, 0, 1, 1], [], []>} : vector<24x128xf32>, vector<128x128xf32>, vector<24x128xf32> -> vector<24x128xf32>
    %28 = vector.extract_strided_slice %0 {offsets = [3, 0], sizes = [1, 128], strides = [1, 1]} : vector<4x128xf32> to vector<1x128xf32>
    %29 = vector.broadcast %28 : vector<1x128xf32> to vector<24x128xf32>
    %30 = arith.addf %27, %29 : vector<24x128xf32>
    %c0_18 = arith.constant 0 : index
    %c0_19 = arith.constant 0 : index
    %31 = vector.load %arg5[%c0_18, %c0_19] : memref<24x128xf32, #tpu.memory_space<vmem>>, vector<24x128xf32>
    tpu.vector_store %arg5[%c0_18, %c0_19], %30 {strides = array<i32>} : memref<24x128xf32, #tpu.memory_space<vmem>>, vector<24x128xf32>,
    return
  }
  func.func @transform_0(%arg0: i32) -> (i32, i32) {
    %c0_i32 = arith.constant 0 : i32
    %c0_i32_0 = arith.constant 0 : i32
    return %arg0, %c0_i32 : i32, i32
  }
  func.func @transform_1(%arg0: i32) -> (i32, i32) {
    %c0_i32 = arith.constant 0 : i32
    %c0_i32_0 = arith.constant 0 : i32
    %c0_i32_1 = arith.constant 0 : i32
    return %c0_i32, %c0_i32_0 : i32, i32
  }
  func.func @transform_2(%arg0: i32) -> (i32, i32, i32) {
    %c0_i32 = arith.constant 0 : i32
    %c0_i32_0 = arith.constant 0 : i32
    %c0_i32_1 = arith.constant 0 : i32
    %c0_i32_2 = arith.constant 0 : i32
    return %c0_i32, %c0_i32_0, %c0_i32_1 : i32, i32, i32
  }
  func.func @transform_3(%arg0: i32) -> (i32, i32) {
    %c0_i32 = arith.constant 0 : i32
    %c0_i32_0 = arith.constant 0 : i32
    %c0_i32_1 = arith.constant 0 : i32
    return %c0_i32, %c0_i32_0 : i32, i32
  }
  func.func @transform_4(%arg0: i32) -> (i32, i32) {
    %c0_i32 = arith.constant 0 : i32
    %c0_i32_0 = arith.constant 0 : i32
    return %arg0, %c0_i32 : i32, i32
  }
}

</mosaic_0001>

<llo_original>
// kernel: six_axis_nn_forward.1
$region0: #{six_axis_nn_forward.1}
  #allocation0 [shape = 'u32[]', space=smem, size = 0x4, offset = 0x4, fixed_abs, tag = 'smem constant byte address 0x4 - core index']
  #allocation1 [shape = 'u32[144,128]{1,0:T(1,128)}', space=vmem, size = 0x12000, scoped, tag = 'internal scratch']
  %s0 = inlined_call_operand.vmem [shape: f32[24,64], index: 0, kind: input, shape index: {}]
  %s1 = inlined_call_operand.vmem [shape: f32[64,128], index: 1, kind: input, shape index: {}]
  %s2 = inlined_call_operand.vmem [shape: f32[3,128,128], index: 2, kind: input, shape index: {}]
  %s3 = inlined_call_operand.vmem [shape: f32[4,128], index: 3, kind: input, shape index: {}]
  %s4 = inlined_call_operand.vmem [shape: f32[24,128], index: 4, kind: output, shape index: {}]
  %s5 = sld [smem:[#allocation0]]
  $region26: #{six_axis_nn_forward.1} parent=0
    _
  %s7 = ssub.s32 1, %s5
  %s8 = scalar_select 0, %s7, %s5
  // Predicated region
  $region2: #{six_axis_nn_forward.1} parent=0 // pred_check
    _
  $region3: #{six_axis_nn_forward.1} parent=0 // pred_check_branch
    %10 = sbr.rel (0) target = $region5
  $region4: #{six_axis_nn_forward.1} parent=0 // pred_region
    _
  $region5: #{six_axis_nn_forward.1} parent=0 // pred_fallthru
    _
  // Predicated region
  $region6: #{six_axis_nn_forward.1} parent=0 // pred_check
    _
  $region7: #{six_axis_nn_forward.1} parent=0 // pred_check_branch
    %12 = sbr.rel (0) target = $region9
  $region8: #{six_axis_nn_forward.1} parent=0 // pred_region
    _
  $region9: #{six_axis_nn_forward.1} parent=0 // pred_fallthru
    _
  // Predicated region
  $region10: #{six_axis_nn_forward.1} parent=0 // pred_check
    _
  $region11: #{six_axis_nn_forward.1} parent=0 // pred_check_branch
    %14 = sbr.rel (0) target = $region13
  $region12: #{six_axis_nn_forward.1} parent=0 // pred_region
    _
  $region13: #{six_axis_nn_forward.1} parent=0 // pred_fallthru
    _
  // Predicated region
  $region14: #{six_axis_nn_forward.1} parent=0 // pred_check
    _
  $region15: #{six_axis_nn_forward.1} parent=0 // pred_check_branch
    %16 = sbr.rel (0) target = $region17
  $region16: #{six_axis_nn_forward.1} parent=0 // pred_region
    _
  $region17: #{six_axis_nn_forward.1} parent=0 // pred_fallthru
    _
  %v17 = vld [vmem:[%s3] sm:$0xf]
  %v18 = vld [vmem:[%s0] sm:$0xff]
  %v19 = vld [vmem:[%s0 + $0x8] sm:$0xff]
  %v20 = vld [vmem:[%s0 + $0x10] sm:$0xff]
  %v21 = vld [vmem:[%s1] sm:$0xff]
  %v22 = vld [vmem:[%s1 + $0x8] sm:$0xff]
  %v23 = vld [vmem:[%s1 + $0x10] sm:$0xff]
  %v24 = vld [vmem:[%s1 + $0x18] sm:$0xff]
  %v25 = vld [vmem:[%s1 + $0x20] sm:$0xff]
  %v26 = vld [vmem:[%s1 + $0x28] sm:$0xff]
  %v27 = vld [vmem:[%s1 + $0x30] sm:$0xff]
  %v28 = vld [vmem:[%s1 + $0x38] sm:$0xff]
  %v29 = vlaneseq
  %v30 = vshrl.u32 %v29, 7
  %v31 = vsub.s32 0, %v30
  %v32 = vrot.slane %v17, %v31
  %vm33 = vcmask 523264
  %v35 = vsel %vm33, %v18, 0
  %v38 = vsel %vm33, %v19, 0
  %v41 = vsel %vm33, %v20, 0
  %43 = vmatprep.subr.mxu0 0.0
  %44 = vmatpush1.msra.mxu0 %v21
  %45 = vmatprep.subr.mxu0 0.0
  %46 = vmatpush1.msra.mxu0 %v22
  %47 = vmatprep.subr.mxu0 0.0
  %48 = vmatpush1.msra.mxu0 %v23
  %49 = vmatprep.subr.mxu0 0.0
  %50 = vmatpush1.msra.mxu0 %v24
  %51 = vmatprep.subr.mxu0 0.0
  %52 = vmatpush1.msra.mxu0 %v25
  %53 = vmatprep.subr.mxu0 0.0
  %54 = vmatpush1.msra.mxu0 %v26
  %55 = vmatprep.subr.mxu0 0.0
  %56 = vmatpush1.msra.mxu0 %v27
  %57 = vmatprep.subr.mxu0 0.0
  %58 = vmatpush1.msra.mxu0 %v28
  %59 = vmatprep.subr.mxu0 0.0
  %60 = vmatpush1.msra.mxu0 0.0
  %61 = vmatprep.subr.mxu0 0.0
  %62 = vmatpush1.msra.mxu0 0.0
  %63 = vmatprep.subr.mxu0 0.0
  %64 = vmatpush1.msra.mxu0 0.0
  %65 = vmatprep.subr.mxu0 0.0
  %66 = vmatpush1.msra.mxu0 0.0
  %67 = vmatprep.subr.mxu0 0.0
  %68 = vmatpush1.msra.mxu0 0.0
  %69 = vmatprep.subr.mxu0 0.0
  %70 = vmatpush1.msra.mxu0 0.0
  %71 = vmatprep.subr.mxu0 0.0
  %72 = vmatpush1.msra.mxu0 0.0
  %73 = vmatprep.subr.mxu0 0.0
  %74 = vmatpush1.msra.mxu0 0.0
  %75 = vmatprep.subr.mxu0 0.0
  %76 = vmatpush1.msra.mxu0 0.0
  %77 = vmatprep.subr.mxu0 0.0
  %78 = vmatpush1.msra.mxu0 0.0
  %79 = vmatprep.subr.mxu0 0.0
  %80 = vmatpush1.msra.mxu0 0.0
  %81 = vmatprep.subr.mxu0 0.0
  %82 = vmatpush1.msra.mxu0 0.0
  %83 = vmatprep.subr.mxu0 0.0
  %84 = vmatpush1.msra.mxu0 0.0
  %85 = vmatprep.subr.mxu0 0.0
  %86 = vmatpush1.msra.mxu0 0.0
  %87 = vmatprep.subr.mxu0 0.0
  %88 = vmatpush1.msra.mxu0 0.0
  %89 = vmatprep.subr.mxu0 0.0
  %90 = vmatpush1.msra.mxu0 0.0
  %91 = vmatprep.subr.mxu0 0.0
  %92 = vmatpush1.msra.mxu0 0.0
  %93 = vmatprep.subr.mxu0 0.0
  %94 = vmatpush1.msra.mxu0 0.0
  %95 = vmatprep.subr.mxu0 0.0
  %96 = vmatpush1.msra.mxu0 0.0
  %97 = vmatprep.subr.mxu0 0.0
  %98 = vmatpush1.msra.mxu0 0.0
  %99 = vmatprep.subr.mxu0 0.0
  %100 = vmatpush1.msra.mxu0 0.0
  %101 = vmatprep.subr.mxu0 0.0
  %102 = vmatpush1.msra.mxu0 0.0
  %103 = vmatprep.subr.mxu0 0.0
  %104 = vmatpush1.msra.mxu0 0.0
  %105 = vmatprep.subr.mxu0 0.0
  %106 = vmatpush1.msra.mxu0 0.0
  %107 = vmatprep.mubr.f32.mxu0 0.0
  %108 = vmatmul.mubr.f32.gmra.mrb[0].mxu0 %v35
  %v109 = vpop.f32.mrb[0].mxu0
  %v110 = vadd.f32 %v32, %v109
  %v111 = vpop.f32.mrb[0].mxu0
  %112 = vmatprep.mubr.f32.mxu0 0.0
  %113 = vmatmul.mubr.f32.gmra.mrb[0].mxu0 %v38
  %v114 = vpop.f32.mrb[0].mxu0
  %v115 = vadd.f32 %v32, %v114
  %v116 = vpop.f32.mrb[0].mxu0
  %117 = vmatprep.mubr.f32.mxu0 0.0
  %118 = vmatmul.mubr.f32.gmra.mrb[0].mxu0 %v41
  %v119 = vpop.f32.mrb[0].mxu0
  %v120 = vadd.f32 %v32, %v119
  %v121 = vpop.f32.mrb[0].mxu0
  %122 = vdwg.mxu0
  %v123 = vmax.f32 %v110, 0.0
  %v124 = vmax.f32 %v115, 0.0
  %v125 = vmax.f32 %v120, 0.0
  %v126 = vld [vmem:[%s2] sm:$0xff]
  %v127 = vld [vmem:[%s2 + $0x8] sm:$0xff]
  %v128 = vld [vmem:[%s2 + $0x10] sm:$0xff]
  %v129 = vld [vmem:[%s2 + $0x18] sm:$0xff]
  %v130 = vld [vmem:[%s2 + $0x20] sm:$0xff]
  %v131 = vld [vmem:[%s2 + $0x28] sm:$0xff]
  %v132 = vld [vmem:[%s2 + $0x30] sm:$0xff]
  %v133 = vld [vmem:[%s2 + $0x38] sm:$0xff]
  %v134 = vld [vmem:[%s2 + $0x40] sm:$0xff]
  %v135 = vld [vmem:[%s2 + $0x48] sm:$0xff]
  %v136 = vld [vmem:[%s2 + $0x50] sm:$0xff]
  %v137 = vld [vmem:[%s2 + $0x58] sm:$0xff]
  %v138 = vld [vmem:[%s2 + $0x60] sm:$0xff]
  %v139 = vld [vmem:[%s2 + $0x68] sm:$0xff]
  %v140 = vld [vmem:[%s2 + $0x70] sm:$0xff]
  %v141 = vld [vmem:[%s2 + $0x78] sm:$0xff]
  %v142 = vlaneseq
  %v143 = vshrl.u32 %v142, 7
  %v144 = vsub.s32 1, %v143
  %v145 = vrot.slane %v17, %v144
  %146 = vmatprep.subr.mxu0 0.0
  %147 = vmatpush1.msra.mxu0 %v126
  %148 = vmatprep.subr.mxu0 0.0
  %149 = vmatpush1.msra.mxu0 %v127
  %150 = vmatprep.subr.mxu0 0.0
  %151 = vmatpush1.msra.mxu0 %v128
  %152 = vmatprep.subr.mxu0 0.0
  %153 = vmatpush1.msra.mxu0 %v129
  %154 = vmatprep.subr.mxu0 0.0
  %155 = vmatpush1.msra.mxu0 %v130
  %156 = vmatprep.subr.mxu0 0.0
  %157 = vmatpush1.msra.mxu0 %v131
  %158 = vmatprep.subr.mxu0 0.0
  %159 = vmatpush1.msra.mxu0 %v132
  %160 = vmatprep.subr.mxu0 0.0
  %161 = vmatpush1.msra.mxu0 %v133
  %162 = vmatprep.subr.mxu0 0.0
  %163 = vmatpush1.msra.mxu0 %v134
  %164 = vmatprep.subr.mxu0 0.0
  %165 = vmatpush1.msra.mxu0 %v135
  %166 = vmatprep.subr.mxu0 0.0
  %167 = vmatpush1.msra.mxu0 %v136
  %168 = vmatprep.subr.mxu0 0.0
  %169 = vmatpush1.msra.mxu0 %v137
  %170 = vmatprep.subr.mxu0 0.0
  %171 = vmatpush1.msra.mxu0 %v138
  %172 = vmatprep.subr.mxu0 0.0
  %173 = vmatpush1.msra.mxu0 %v139
  %174 = vmatprep.subr.mxu0 0.0
  %175 = vmatpush1.msra.mxu0 %v140
  %176 = vmatprep.subr.mxu0 0.0
  %177 = vmatpush1.msra.mxu0 %v141
  %178 = vmatprep.subr.mxu0 0.0
  %179 = vmatpush1.msra.mxu0 0.0
  %180 = vmatprep.subr.mxu0 0.0
  %181 = vmatpush1.msra.mxu0 0.0
  %182 = vmatprep.subr.mxu0 0.0
  %183 = vmatpush1.msra.mxu0 0.0
  %184 = vmatprep.subr.mxu0 0.0
  %185 = vmatpush1.msra.mxu0 0.0
  %186 = vmatprep.subr.mxu0 0.0
  %187 = vmatpush1.msra.mxu0 0.0
  %188 = vmatprep.subr.mxu0 0.0
  %189 = vmatpush1.msra.mxu0 0.0
  %190 = vmatprep.subr.mxu0 0.0
  %191 = vmatpush1.msra.mxu0 0.0
  %192 = vmatprep.subr.mxu0 0.0
  %193 = vmatpush1.msra.mxu0 0.0
  %194 = vmatprep.subr.mxu0 0.0
  %195 = vmatpush1.msra.mxu0 0.0
  %196 = vmatprep.subr.mxu0 0.0
  %197 = vmatpush1.msra.mxu0 0.0
  %198 = vmatprep.subr.mxu0 0.0
  %199 = vmatpush1.msra.mxu0 0.0
  %200 = vmatprep.subr.mxu0 0.0
  %201 = vmatpush1.msra.mxu0 0.0
  %202 = vmatprep.subr.mxu0 0.0
  %203 = vmatpush1.msra.mxu0 0.0
  %204 = vmatprep.subr.mxu0 0.0
  %205 = vmatpush1.msra.mxu0 0.0
  %206 = vmatprep.subr.mxu0 0.0
  %207 = vmatpush1.msra.mxu0 0.0
  %208 = vmatprep.subr.mxu0 0.0
  %209 = vmatpush1.msra.mxu0 0.0
  %210 = vmatprep.mubr.f32.mxu0 0.0
  %211 = vmatmul.mubr.f32.gmra.mrb[0].mxu0 %v123
  %v212 = vpop.f32.mrb[0].mxu0
  %v213 = vadd.f32 %v145, %v212
  %v214 = vpop.f32.mrb[0].mxu0
  %215 = vmatprep.mubr.f32.mxu0 0.0
  %216 = vmatmul.mubr.f32.gmra.mrb[0].mxu0 %v124
  %v217 = vpop.f32.mrb[0].mxu0
  %v218 = vadd.f32 %v145, %v217
  %v219 = vpop.f32.mrb[0].mxu0
  %220 = vmatprep.mubr.f32.mxu0 0.0
  %221 = vmatmul.mubr.f32.gmra.mrb[0].mxu0 %v125
  %v222 = vpop.f32.mrb[0].mxu0
  %v223 = vadd.f32 %v145, %v222
  %v224 = vpop.f32.mrb[0].mxu0
  %225 = vdwg.mxu0
  %v226 = vmax.f32 %v213, 0.0
  %v227 = vmax.f32 %v218, 0.0
  %v228 = vmax.f32 %v223, 0.0
  %s229 = scalar_lea.vmem %s2, 128
  %v230 = vld [vmem:[%s229] sm:$0xff]
  %v231 = vld [vmem:[%s229 + $0x8] sm:$0xff]
  %v232 = vld [vmem:[%s229 + $0x10] sm:$0xff]
  %v233 = vld [vmem:[%s229 + $0x18] sm:$0xff]
  %v234 = vld [vmem:[%s229 + $0x20] sm:$0xff]
  %v235 = vld [vmem:[%s229 + $0x28] sm:$0xff]
  %v236 = vld [vmem:[%s229 + $0x30] sm:$0xff]
  %v237 = vld [vmem:[%s229 + $0x38] sm:$0xff]
  %v238 = vld [vmem:[%s229 + $0x40] sm:$0xff]
  %v239 = vld [vmem:[%s229 + $0x48] sm:$0xff]
  %v240 = vld [vmem:[%s229 + $0x50] sm:$0xff]
  %v241 = vld [vmem:[%s229 + $0x58] sm:$0xff]
  %v242 = vld [vmem:[%s229 + $0x60] sm:$0xff]
  %v243 = vld [vmem:[%s229 + $0x68] sm:$0xff]
  %v244 = vld [vmem:[%s229 + $0x70] sm:$0xff]
  %v245 = vld [vmem:[%s229 + $0x78] sm:$0xff]
  %v246 = vlaneseq
  %v247 = vshrl.u32 %v246, 7
  %v248 = vsub.s32 2, %v247
  %v249 = vrot.slane %v17, %v248
  %250 = vmatprep.subr.mxu0 0.0
  %251 = vmatpush1.msra.mxu0 %v230
  %252 = vmatprep.subr.mxu0 0.0
  %253 = vmatpush1.msra.mxu0 %v231
  %254 = vmatprep.subr.mxu0 0.0
  %255 = vmatpush1.msra.mxu0 %v232
  %256 = vmatprep.subr.mxu0 0.0
  %257 = vmatpush1.msra.mxu0 %v233
  %258 = vmatprep.subr.mxu0 0.0
  %259 = vmatpush1.msra.mxu0 %v234
  %260 = vmatprep.subr.mxu0 0.0
  %261 = vmatpush1.msra.mxu0 %v235
  %262 = vmatprep.subr.mxu0 0.0
  %263 = vmatpush1.msra.mxu0 %v236
  %264 = vmatprep.subr.mxu0 0.0
  %265 = vmatpush1.msra.mxu0 %v237
  %266 = vmatprep.subr.mxu0 0.0
  %267 = vmatpush1.msra.mxu0 %v238
  %268 = vmatprep.subr.mxu0 0.0
  %269 = vmatpush1.msra.mxu0 %v239
  %270 = vmatprep.subr.mxu0 0.0
  %271 = vmatpush1.msra.mxu0 %v240
  %272 = vmatprep.subr.mxu0 0.0
  %273 = vmatpush1.msra.mxu0 %v241
  %274 = vmatprep.subr.mxu0 0.0
  %275 = vmatpush1.msra.mxu0 %v242
  %276 = vmatprep.subr.mxu0 0.0
  %277 = vmatpush1.msra.mxu0 %v243
  %278 = vmatprep.subr.mxu0 0.0
  %279 = vmatpush1.msra.mxu0 %v244
  %280 = vmatprep.subr.mxu0 0.0
  %281 = vmatpush1.msra.mxu0 %v245
  %282 = vmatprep.subr.mxu0 0.0
  %283 = vmatpush1.msra.mxu0 0.0
  %284 = vmatprep.subr.mxu0 0.0
  %285 = vmatpush1.msra.mxu0 0.0
  %286 = vmatprep.subr.mxu0 0.0
  %287 = vmatpush1.msra.mxu0 0.0
  %288 = vmatprep.subr.mxu0 0.0
  %289 = vmatpush1.msra.mxu0 0.0
  %290 = vmatprep.subr.mxu0 0.0
  %291 = vmatpush1.msra.mxu0 0.0
  %292 = vmatprep.subr.mxu0 0.0
  %293 = vmatpush1.msra.mxu0 0.0
  %294 = vmatprep.subr.mxu0 0.0
  %295 = vmatpush1.msra.mxu0 0.0
  %296 = vmatprep.subr.mxu0 0.0
  %297 = vmatpush1.msra.mxu0 0.0
  %298 = vmatprep.subr.mxu0 0.0
  %299 = vmatpush1.msra.mxu0 0.0
  %300 = vmatprep.subr.mxu0 0.0
  %301 = vmatpush1.msra.mxu0 0.0
  %302 = vmatprep.subr.mxu0 0.0
  %303 = vmatpush1.msra.mxu0 0.0
  %304 = vmatprep.subr.mxu0 0.0
  %305 = vmatpush1.msra.mxu0 0.0
  %306 = vmatprep.subr.mxu0 0.0
  %307 = vmatpush1.msra.mxu0 0.0
  %308 = vmatprep.subr.mxu0 0.0
  %309 = vmatpush1.msra.mxu0 0.0
  %310 = vmatprep.subr.mxu0 0.0
  %311 = vmatpush1.msra.mxu0 0.0
  %312 = vmatprep.subr.mxu0 0.0
  %313 = vmatpush1.msra.mxu0 0.0
  %314 = vmatprep.mubr.f32.mxu0 0.0
  %315 = vmatmul.mubr.f32.gmra.mrb[0].mxu0 %v226
  %v316 = vpop.f32.mrb[0].mxu0
  %v317 = vadd.f32 %v249, %v316
  %v318 = vpop.f32.mrb[0].mxu0
  %319 = vmatprep.mubr.f32.mxu0 0.0
  %320 = vmatmul.mubr.f32.gmra.mrb[0].mxu0 %v227
  %v321 = vpop.f32.mrb[0].mxu0
  %v322 = vadd.f32 %v249, %v321
  %v323 = vpop.f32.mrb[0].mxu0
  %324 = vmatprep.mubr.f32.mxu0 0.0
  %325 = vmatmul.mubr.f32.gmra.mrb[0].mxu0 %v228
  %v326 = vpop.f32.mrb[0].mxu0
  %v327 = vadd.f32 %v249, %v326
  %v328 = vpop.f32.mrb[0].mxu0
  %329 = vdwg.mxu0
  %v330 = vmax.f32 %v317, 0.0
  %v331 = vmax.f32 %v322, 0.0
  %v332 = vmax.f32 %v327, 0.0
  %s333 = scalar_lea.vmem %s2, 256
  %v334 = vld [vmem:[%s333] sm:$0xff]
  %v335 = vld [vmem:[%s333 + $0x8] sm:$0xff]
  %v336 = vld [vmem:[%s333 + $0x10] sm:$0xff]
  %v337 = vld [vmem:[%s333 + $0x18] sm:$0xff]
  %v338 = vld [vmem:[%s333 + $0x20] sm:$0xff]
  %v339 = vld [vmem:[%s333 + $0x28] sm:$0xff]
  %v340 = vld [vmem:[%s333 + $0x30] sm:$0xff]
  %v341 = vld [vmem:[%s333 + $0x38] sm:$0xff]
  %v342 = vld [vmem:[%s333 + $0x40] sm:$0xff]
  %v343 = vld [vmem:[%s333 + $0x48] sm:$0xff]
  %v344 = vld [vmem:[%s333 + $0x50] sm:$0xff]
  %v345 = vld [vmem:[%s333 + $0x58] sm:$0xff]
  %v346 = vld [vmem:[%s333 + $0x60] sm:$0xff]
  %v347 = vld [vmem:[%s333 + $0x68] sm:$0xff]
  %v348 = vld [vmem:[%s333 + $0x70] sm:$0xff]
  %v349 = vld [vmem:[%s333 + $0x78] sm:$0xff]
  %v350 = vlaneseq
  %v351 = vshrl.u32 %v350, 7
  %v352 = vsub.s32 3, %v351
  %v353 = vrot.slane %v17, %v352
  %354 = vmatprep.subr.mxu0 0.0
  %355 = vmatpush1.msra.mxu0 %v334
  %356 = vmatprep.subr.mxu0 0.0
  %357 = vmatpush1.msra.mxu0 %v335
  %358 = vmatprep.subr.mxu0 0.0
  %359 = vmatpush1.msra.mxu0 %v336
  %360 = vmatprep.subr.mxu0 0.0
  %361 = vmatpush1.msra.mxu0 %v337
  %362 = vmatprep.subr.mxu0 0.0
  %363 = vmatpush1.msra.mxu0 %v338
  %364 = vmatprep.subr.mxu0 0.0
  %365 = vmatpush1.msra.mxu0 %v339
  %366 = vmatprep.subr.mxu0 0.0
  %367 = vmatpush1.msra.mxu0 %v340
  %368 = vmatprep.subr.mxu0 0.0
  %369 = vmatpush1.msra.mxu0 %v341
  %370 = vmatprep.subr.mxu0 0.0
  %371 = vmatpush1.msra.mxu0 %v342
  %372 = vmatprep.subr.mxu0 0.0
  %373 = vmatpush1.msra.mxu0 %v343
  %374 = vmatprep.subr.mxu0 0.0
  %375 = vmatpush1.msra.mxu0 %v344
  %376 = vmatprep.subr.mxu0 0.0
  %377 = vmatpush1.msra.mxu0 %v345
  %378 = vmatprep.subr.mxu0 0.0
  %379 = vmatpush1.msra.mxu0 %v346
  %380 = vmatprep.subr.mxu0 0.0
  %381 = vmatpush1.msra.mxu0 %v347
  %382 = vmatprep.subr.mxu0 0.0
  %383 = vmatpush1.msra.mxu0 %v348
  %384 = vmatprep.subr.mxu0 0.0
  %385 = vmatpush1.msra.mxu0 %v349
  %386 = vmatprep.subr.mxu0 0.0
  %387 = vmatpush1.msra.mxu0 0.0
  %388 = vmatprep.subr.mxu0 0.0
  %389 = vmatpush1.msra.mxu0 0.0
  %390 = vmatprep.subr.mxu0 0.0
  %391 = vmatpush1.msra.mxu0 0.0
  %392 = vmatprep.subr.mxu0 0.0
  %393 = vmatpush1.msra.mxu0 0.0
  %394 = vmatprep.subr.mxu0 0.0
  %395 = vmatpush1.msra.mxu0 0.0
  %396 = vmatprep.subr.mxu0 0.0
  %397 = vmatpush1.msra.mxu0 0.0
  %398 = vmatprep.subr.mxu0 0.0
  %399 = vmatpush1.msra.mxu0 0.0
  %400 = vmatprep.subr.mxu0 0.0
  %401 = vmatpush1.msra.mxu0 0.0
  %402 = vmatprep.subr.mxu0 0.0
  %403 = vmatpush1.msra.mxu0 0.0
  %404 = vmatprep.subr.mxu0 0.0
  %405 = vmatpush1.msra.mxu0 0.0
  %406 = vmatprep.subr.mxu0 0.0
  %407 = vmatpush1.msra.mxu0 0.0
  %408 = vmatprep.subr.mxu0 0.0
  %409 = vmatpush1.msra.mxu0 0.0
  %410 = vmatprep.subr.mxu0 0.0
  %411 = vmatpush1.msra.mxu0 0.0
  %412 = vmatprep.subr.mxu0 0.0
  %413 = vmatpush1.msra.mxu0 0.0
  %414 = vmatprep.subr.mxu0 0.0
  %415 = vmatpush1.msra.mxu0 0.0
  %416 = vmatprep.subr.mxu0 0.0
  %417 = vmatpush1.msra.mxu0 0.0
  %418 = vmatprep.mubr.f32.mxu0 0.0
  %419 = vmatmul.mubr.f32.gmra.mrb[0].mxu0 %v330
  %v420 = vpop.f32.mrb[0].mxu0
  %v421 = vadd.f32 %v353, %v420
  %v422 = vpop.f32.mrb[0].mxu0
  %423 = vmatprep.mubr.f32.mxu0 0.0
  %424 = vmatmul.mubr.f32.gmra.mrb[0].mxu0 %v331
  %v425 = vpop.f32.mrb[0].mxu0
  %v426 = vadd.f32 %v353, %v425
  %v427 = vpop.f32.mrb[0].mxu0
  %428 = vmatprep.mubr.f32.mxu0 0.0
  %429 = vmatmul.mubr.f32.gmra.mrb[0].mxu0 %v332
  %v430 = vpop.f32.mrb[0].mxu0
  %v431 = vadd.f32 %v353, %v430
  %v432 = vpop.f32.mrb[0].mxu0
  %433 = vdwg.mxu0
  %434 = vst [vmem:[%s4] sm:$0xff] %v421
  %435 = vst [vmem:[%s4 + $0x8] sm:$0xff] %v426
  %436 = vst [vmem:[%s4 + $0x10] sm:$0xff] %v431
  // Predicated region
  $region18: #{six_axis_nn_forward.1} parent=0 // pred_check
    _
  $region19: #{six_axis_nn_forward.1} parent=0 // pred_check_branch
    %438 = sbr.rel (0) target = $region21
  $region20: #{six_axis_nn_forward.1} parent=0 // pred_region
    _
  $region21: #{six_axis_nn_forward.1} parent=0 // pred_fallthru
    _
  // Predicated region
  $region22: #{six_axis_nn_forward.1} parent=0 // pred_check
    _
  $region23: #{six_axis_nn_forward.1} parent=0 // pred_check_branch
    %440 = sbr.rel (0) target = $region25
  $region24: #{six_axis_nn_forward.1} parent=0 // pred_region
    _
  $region25: #{six_axis_nn_forward.1} parent=0 // pred_fallthru
    _

</llo_original>
